<compile_context>
chip_gen: v6e
topology: v6e:2x2x1
jax: 0.10.0
libtpu: 0.0.40
codegen_flags: <defaults>
</compile_context>

<pallas_src>
import functools
import math

import jax
import jax.numpy as jnp
from jax.experimental import pallas as pl
from jax.experimental.pallas import tpu as pltpu


def _round_up(x, m):
    return ((x + m - 1) // m) * m


# ---------------------------------------------------------------------------
# Linear:  y = x @ W + b     (row-tiled, weights resident in VMEM)
# ---------------------------------------------------------------------------
def _linear_kernel(x_ref, w_ref, b_ref, o_ref):
    y = jnp.dot(x_ref[...], w_ref[...], preferred_element_type=jnp.float32)
    o_ref[...] = (y + b_ref[...].astype(jnp.float32)).astype(o_ref.dtype)


def _linear(x2d, w, b, *, out_dtype, tile_m=256):
    rows, d_in = x2d.shape
    d_out = w.shape[1]
    # Row tile: large (256) when possible, padded so the tile is a multiple of 8.
    tm = min(tile_m, _round_up(rows, 8))
    pad = (-rows) % tm
    if pad:
        x2d = jnp.pad(x2d, ((0, pad), (0, 0)))
    prows = rows + pad

    out = pl.pallas_call(
        _linear_kernel,
        out_shape=jax.ShapeDtypeStruct((prows, d_out), out_dtype),
        grid_spec=pltpu.PrefetchScalarGridSpec(
            num_scalar_prefetch=0,
            grid=(prows // tm,),
            in_specs=[
                pl.BlockSpec((tm, d_in), lambda i: (i, 0)),
                pl.BlockSpec((d_in, d_out), lambda i: (0, 0)),
                pl.BlockSpec((1, d_out), lambda i: (0, 0)),
            ],
            out_specs=pl.BlockSpec((tm, d_out), lambda i: (i, 0)),
        ),
        compiler_params=pltpu.CompilerParams(
            dimension_semantics=("parallel",)),
    )(x2d, w, b.reshape(1, d_out))
    # TODO(synk): for very large d_in/d_out add a reduction grid axis with a
    # VMEM accumulator instead of keeping the whole weight resident.
    return out[:rows] if pad else out


# ---------------------------------------------------------------------------
# Scaled dot-product attention, one (batch, head, q-tile) per grid step.
# ---------------------------------------------------------------------------
def _attention_kernel(q_ref, k_ref, v_ref, mask_ref, o_ref, *, scale):
    q = q_ref[0, 0]           # (tq, d_k)
    k = k_ref[0, 0]           # (S,  d_k)
    v = v_ref[0, 0]           # (S,  d_k)
    m = mask_ref[0]           # (tq, S)

    # scores = q @ k^T * scale   (contract last dims; avoids explicit transpose)
    s = jax.lax.dot_general(q, k, (((1,), (1,)), ((), ())),
                            preferred_element_type=jnp.float32) * scale
    s = jnp.where(m == 0, -1e9, s)

    # numerically-stable softmax over keys
    s = s - jnp.max(s, axis=-1, keepdims=True)
    p = jnp.exp(s)
    p = p / jnp.sum(p, axis=-1, keepdims=True)
    # dropout on attention probabilities == identity in eval mode
    # TODO(synk): train-mode dropout via pltpu.prng_seed / stateful_bernoulli.

    ctx = jnp.dot(p.astype(v.dtype), v, preferred_element_type=jnp.float32)
    o_ref[0, 0] = ctx.astype(o_ref.dtype)


def _attention(qh, kh, vh, mask, *, out_dtype, tile_q=256):
    B, H, S, Dk = qh.shape
    tq = min(tile_q, _round_up(S, 8))
    pad = (-S) % tq
    if pad:
        qh = jnp.pad(qh, ((0, 0), (0, 0), (0, pad), (0, 0)))
        mask = jnp.pad(mask, ((0, 0), (0, pad), (0, 0)))   # padded rows: all-masked
    Sq = S + pad
    scale = 1.0 / math.sqrt(Dk)

    out = pl.pallas_call(
        functools.partial(_attention_kernel, scale=scale),
        out_shape=jax.ShapeDtypeStruct((B, H, Sq, Dk), out_dtype),
        grid_spec=pltpu.PrefetchScalarGridSpec(
            num_scalar_prefetch=0,
            grid=(B, H, Sq // tq),
            in_specs=[
                pl.BlockSpec((1, 1, tq, Dk), lambda b, h, i: (b, h, i, 0)),
                pl.BlockSpec((1, 1, S, Dk), lambda b, h, i: (b, h, 0, 0)),
                pl.BlockSpec((1, 1, S, Dk), lambda b, h, i: (b, h, 0, 0)),
                pl.BlockSpec((1, tq, S), lambda b, h, i: (b, i, 0)),
            ],
            out_specs=pl.BlockSpec((1, 1, tq, Dk), lambda b, h, i: (b, h, i, 0)),
        ),
        compiler_params=pltpu.CompilerParams(
            dimension_semantics=("parallel", "parallel", "parallel")),
    )(qh, kh, vh, mask)
    # TODO(synk): for long sequences, tile K/V with an online-softmax
    # (flash-style) reduction axis instead of keeping full K/V resident.
    return out[:, :, :S] if pad else out


# ---------------------------------------------------------------------------
# Full MultiHeadAttention forward (mirrors the torch module's forward(q, v, k, mask))
# ---------------------------------------------------------------------------
@functools.partial(jax.jit,
                   static_argnames=("h", "tile_m", "tile_q", "matmul_dtype"))
def multi_head_attention(q, v, k, mask, params, *, h, tile_m=256, tile_q=256,
                         matmul_dtype=None):
    wq, bq, wk, bk, wv, bv, wo, bo = params
    B, S, D = q.shape
    assert D % h == 0, "d_model should be divisible by h"
    d_k = D // h
    out_dtype = q.dtype

    def maybe_cast(a):
        return a.astype(matmul_dtype) if matmul_dtype is not None else a

    def proj(x, w, b):
        y = _linear(maybe_cast(x.reshape(B * S, D)), maybe_cast(w), b,
                    out_dtype=out_dtype, tile_m=tile_m)
        return y.reshape(B, S, D)

    Q = proj(q, wq, bq)      # query = w_q(q)
    K = proj(k, wk, bk)      # key   = w_k(k)
    V = proj(v, wv, bv)      # value = w_v(v)

    def split_heads(x):      # (B, S, D) -> (B, h, S, d_k)
        return x.reshape(B, S, h, d_k).transpose(0, 2, 1, 3)

    if mask is None:
        mask = jnp.ones((B, S, S), jnp.int32)

    ctx = _attention(maybe_cast(split_heads(Q)),
                     maybe_cast(split_heads(K)),
                     maybe_cast(split_heads(V)),
                     mask, out_dtype=out_dtype, tile_q=tile_q)
    # TODO(synk): attention_scores (module side-effect attribute) not returned.

    ctx = ctx.transpose(0, 2, 1, 3).reshape(B * S, D)   # merge heads
    out = _linear(maybe_cast(ctx), maybe_cast(wo), bo,
                  out_dtype=out_dtype, tile_m=tile_m)
    return out.reshape(B, S, D)


def init_params(key, d_model, dtype=jnp.float32):
    """Mirror torch.nn.Linear init: U(-1/sqrt(fan_in), 1/sqrt(fan_in))."""
    keys = jax.random.split(key, 8)
    bound = 1.0 / math.sqrt(d_model)

    def lin(kw, kb):
        w = jax.random.uniform(kw, (d_model, d_model), dtype, -bound, bound)
        b = jax.random.uniform(kb, (d_model,), dtype, -bound, bound)
        return w, b

    wq, bq = lin(keys[0], keys[1])
    wk, bk = lin(keys[2], keys[3])
    wv, bv = lin(keys[4], keys[5])
    wo, bo = lin(keys[6], keys[7])
    return (wq, bq, wk, bk, wv, bv, wo, bo)


if __name__ == "__main__":
    batch, seq, d_model, h = 2, 8, 32, 4

    key = jax.random.PRNGKey(0)
    kq, kv, kk, kp = jax.random.split(key, 4)
    q = jax.random.normal(kq, (batch, seq, d_model), dtype=jnp.float32)
    v = jax.random.normal(kv, (batch, seq, d_model), dtype=jnp.float32)
    k = jax.random.normal(kk, (batch, seq, d_model), dtype=jnp.float32)
    mask = jnp.broadcast_to(jnp.tril(jnp.ones((seq, seq), jnp.int32)),
                            (batch, seq, seq))
    params = init_params(kp, d_model)

    out = multi_head_attention(q, v, k, mask, params, h=h)
    out = jax.block_until_ready(out)

    # ------------------- pure-JAX reference -------------------
    wq, bq, wk, bk, wv, bv, wo, bo = params
    Q = q @ wq + bq
    K = k @ wk + bk
    V = v @ wv + bv
    d_kk = d_model // h

    def sh(x):
        return x.reshape(batch, seq, h, d_kk).transpose(0, 2, 1, 3)

    Qh, Kh, Vh = sh(Q), sh(K), sh(V)
    s = jnp.einsum("bhqd,bhkd->bhqk", Qh, Kh) / math.sqrt(d_kk)
    s = jnp.where(mask[:, None, :, :] == 0, -1e9, s)
    p = jax.nn.softmax(s, axis=-1)
    ref = jnp.einsum("bhqk,bhkd->bhqd", p, Vh)
    ref = ref.transpose(0, 2, 1, 3).reshape(batch, seq, d_model)
    ref = ref @ wo + bo

    assert out.shape == (batch, seq, d_model)
    err = float(jnp.max(jnp.abs(out - ref)))
    assert jnp.allclose(out, ref, atol=1e-4, rtol=1e-4), f"max abs err {err}"

    print("KERNEL_OK")
</pallas_src>

<mosaic_0001>
module attributes {stable_mosaic.version = 11 : i64} {
  func.func @_linear_kernel(%arg0: i32, %arg1: memref<16x32xf32, #tpu.memory_space<vmem>>, %arg2: memref<32x32xf32, #tpu.memory_space<vmem>>, %arg3: memref<1x32xf32, #tpu.memory_space<vmem>>, %arg4: memref<16x32xf32, #tpu.memory_space<vmem>>) attributes {dimension_semantics = [#tpu.dimension_semantics<parallel>], iteration_bounds = array<i64: 1>, scalar_prefetch = 0 : i64, scratch_operands = 0 : i64, tpu.core_type = #tpu.core_type<tc>, window_params = [{transform_indices = @transform_0, window_bounds = array<i64: 16, 32>}, {pipeline_mode = #tpu.pipeline_mode<synchronous>, transform_indices = @transform_1, window_bounds = array<i64: 32, 32>}, {pipeline_mode = #tpu.pipeline_mode<synchronous>, transform_indices = @transform_2, window_bounds = array<i64: 1, 32>}, {transform_indices = @transform_3, window_bounds = array<i64: 16, 32>}]} {
    %c0 = arith.constant 0 : index
    %c0_0 = arith.constant 0 : index
    %0 = vector.load %arg1[%c0, %c0_0] : memref<16x32xf32, #tpu.memory_space<vmem>>, vector<16x32xf32>
    %c0_1 = arith.constant 0 : index
    %c0_2 = arith.constant 0 : index
    %1 = vector.load %arg2[%c0_1, %c0_2] : memref<32x32xf32, #tpu.memory_space<vmem>>, vector<32x32xf32>
    %cst = arith.constant dense<0.000000e+00> : vector<16x32xf32>
    %2 = tpu.matmul %0, %1, %cst {dimension_numbers = #tpu.dot_dimension_numbers<[1], [0], [0], [1], [0, 0, 1, 1], [], []>} : vector<16x32xf32>, vector<32x32xf32>, vector<16x32xf32> -> vector<16x32xf32>
    %c0_3 = arith.constant 0 : index
    %c0_4 = arith.constant 0 : index
    %3 = vector.load %arg3[%c0_3, %c0_4] : memref<1x32xf32, #tpu.memory_space<vmem>>, vector<1x32xf32>
    %4 = vector.broadcast %3 : vector<1x32xf32> to vector<16x32xf32>
    %5 = arith.addf %2, %4 : vector<16x32xf32>
    %c0_5 = arith.constant 0 : index
    %c0_6 = arith.constant 0 : index
    %6 = vector.load %arg4[%c0_5, %c0_6] : memref<16x32xf32, #tpu.memory_space<vmem>>, vector<16x32xf32>
    tpu.vector_store %arg4[%c0_5, %c0_6], %5 {strides = array<i32>} : memref<16x32xf32, #tpu.memory_space<vmem>>, vector<16x32xf32>,
    return
  }
  func.func @transform_0(%arg0: i32) -> (i32, i32) {
    %c0_i32 = arith.constant 0 : i32
    %c0_i32_0 = arith.constant 0 : i32
    return %arg0, %c0_i32 : i32, i32
  }
  func.func @transform_1(%arg0: i32) -> (i32, i32) {
    %c0_i32 = arith.constant 0 : i32
    %c0_i32_0 = arith.constant 0 : i32
    %c0_i32_1 = arith.constant 0 : i32
    return %c0_i32, %c0_i32_0 : i32, i32
  }
  func.func @transform_2(%arg0: i32) -> (i32, i32) {
    %c0_i32 = arith.constant 0 : i32
    %c0_i32_0 = arith.constant 0 : i32
    %c0_i32_1 = arith.constant 0 : i32
    return %c0_i32, %c0_i32_0 : i32, i32
  }
  func.func @transform_3(%arg0: i32) -> (i32, i32) {
    %c0_i32 = arith.constant 0 : i32
    %c0_i32_0 = arith.constant 0 : i32
    return %arg0, %c0_i32 : i32, i32
  }
}

module attributes {stable_mosaic.version = 11 : i64} {
  func.func @_linear_kernel(%arg0: i32, %arg1: memref<16x32xf32, #tpu.memory_space<vmem>>, %arg2: memref<32x32xf32, #tpu.memory_space<vmem>>, %arg3: memref<1x32xf32, #tpu.memory_space<vmem>>, %arg4: memref<16x32xf32, #tpu.memory_space<vmem>>) attributes {dimension_semantics = [#tpu.dimension_semantics<parallel>], iteration_bounds = array<i64: 1>, scalar_prefetch = 0 : i64, scratch_operands = 0 : i64, tpu.core_type = #tpu.core_type<tc>, window_params = [{transform_indices = @transform_0, window_bounds = array<i64: 16, 32>}, {pipeline_mode = #tpu.pipeline_mode<synchronous>, transform_indices = @transform_1, window_bounds = array<i64: 32, 32>}, {pipeline_mode = #tpu.pipeline_mode<synchronous>, transform_indices = @transform_2, window_bounds = array<i64: 1, 32>}, {transform_indices = @transform_3, window_bounds = array<i64: 16, 32>}]} {
    %c0 = arith.constant 0 : index
    %c0_0 = arith.constant 0 : index
    %0 = vector.load %arg1[%c0, %c0_0] : memref<16x32xf32, #tpu.memory_space<vmem>>, vector<16x32xf32>
    %c0_1 = arith.constant 0 : index
    %c0_2 = arith.constant 0 : index
    %1 = vector.load %arg2[%c0_1, %c0_2] : memref<32x32xf32, #tpu.memory_space<vmem>>, vector<32x32xf32>
    %cst = arith.constant dense<0.000000e+00> : vector<16x32xf32>
    %2 = tpu.matmul %0, %1, %cst {dimension_numbers = #tpu.dot_dimension_numbers<[1], [0], [0], [1], [0, 0, 1, 1], [], []>} : vector<16x32xf32>, vector<32x32xf32>, vector<16x32xf32> -> vector<16x32xf32>
    %c0_3 = arith.constant 0 : index
    %c0_4 = arith.constant 0 : index
    %3 = vector.load %arg3[%c0_3, %c0_4] : memref<1x32xf32, #tpu.memory_space<vmem>>, vector<1x32xf32>
    %4 = vector.broadcast %3 : vector<1x32xf32> to vector<16x32xf32>
    %5 = arith.addf %2, %4 : vector<16x32xf32>
    %c0_5 = arith.constant 0 : index
    %c0_6 = arith.constant 0 : index
    %6 = vector.load %arg4[%c0_5, %c0_6] : memref<16x32xf32, #tpu.memory_space<vmem>>, vector<16x32xf32>
    tpu.vector_store %arg4[%c0_5, %c0_6], %5 {strides = array<i32>} : memref<16x32xf32, #tpu.memory_space<vmem>>, vector<16x32xf32>,
    return
  }
  func.func @transform_0(%arg0: i32) -> (i32, i32) {
    %c0_i32 = arith.constant 0 : i32
    %c0_i32_0 = arith.constant 0 : i32
    return %arg0, %c0_i32 : i32, i32
  }
  func.func @transform_1(%arg0: i32) -> (i32, i32) {
    %c0_i32 = arith.constant 0 : i32
    %c0_i32_0 = arith.constant 0 : i32
    %c0_i32_1 = arith.constant 0 : i32
    return %c0_i32, %c0_i32_0 : i32, i32
  }
  func.func @transform_2(%arg0: i32) -> (i32, i32) {
    %c0_i32 = arith.constant 0 : i32
    %c0_i32_0 = arith.constant 0 : i32
    %c0_i32_1 = arith.constant 0 : i32
    return %c0_i32, %c0_i32_0 : i32, i32
  }
  func.func @transform_3(%arg0: i32) -> (i32, i32) {
    %c0_i32 = arith.constant 0 : i32
    %c0_i32_0 = arith.constant 0 : i32
    return %arg0, %c0_i32 : i32, i32
  }
}

module attributes {stable_mosaic.version = 11 : i64} {
  func.func @_attention_kernel(%arg0: i32, %arg1: i32, %arg2: i32, %arg3: memref<1x1x8x8xf32, #tpu.memory_space<vmem>>, %arg4: memref<1x1x8x8xf32, #tpu.memory_space<vmem>>, %arg5: memref<1x1x8x8xf32, #tpu.memory_space<vmem>>, %arg6: memref<1x8x8xi32, #tpu.memory_space<vmem>>, %arg7: memref<1x1x8x8xf32, #tpu.memory_space<vmem>>) attributes {dimension_semantics = [#tpu.dimension_semantics<parallel>, #tpu.dimension_semantics<parallel>, #tpu.dimension_semantics<parallel>], iteration_bounds = array<i64: 2, 4, 1>, scalar_prefetch = 0 : i64, scratch_operands = 0 : i64, tpu.core_type = #tpu.core_type<tc>, window_params = [{transform_indices = @transform_0, window_bounds = array<i64: 1, 1, 8, 8>}, {transform_indices = @transform_1, window_bounds = array<i64: 1, 1, 8, 8>}, {transform_indices = @transform_2, window_bounds = array<i64: 1, 1, 8, 8>}, {transform_indices = @transform_3, window_bounds = array<i64: 1, 8, 8>}, {transform_indices = @transform_4, window_bounds = array<i64: 1, 1, 8, 8>}]} {
    %c0 = arith.constant 0 : index
    %c0_0 = arith.constant 0 : index
    %c0_1 = arith.constant 0 : index
    %c0_2 = arith.constant 0 : index
    %0 = vector.load %arg3[%c0, %c0_0, %c0_1, %c0_2] : memref<1x1x8x8xf32, #tpu.memory_space<vmem>>, vector<1x1x8x8xf32>
    %1 = vector.shape_cast %0 : vector<1x1x8x8xf32> to vector<8x8xf32>
    %c0_3 = arith.constant 0 : index
    %c0_4 = arith.constant 0 : index
    %c0_5 = arith.constant 0 : index
    %c0_6 = arith.constant 0 : index
    %2 = vector.load %arg4[%c0_3, %c0_4, %c0_5, %c0_6] : memref<1x1x8x8xf32, #tpu.memory_space<vmem>>, vector<1x1x8x8xf32>
    %3 = vector.shape_cast %2 : vector<1x1x8x8xf32> to vector<8x8xf32>
    %c0_7 = arith.constant 0 : index
    %c0_8 = arith.constant 0 : index
    %c0_9 = arith.constant 0 : index
    %c0_10 = arith.constant 0 : index
    %4 = vector.load %arg5[%c0_7, %c0_8, %c0_9, %c0_10] : memref<1x1x8x8xf32, #tpu.memory_space<vmem>>, vector<1x1x8x8xf32>
    %5 = vector.shape_cast %4 : vector<1x1x8x8xf32> to vector<8x8xf32>
    %c0_11 = arith.constant 0 : index
    %c0_12 = arith.constant 0 : index
    %c0_13 = arith.constant 0 : index
    %6 = vector.load %arg6[%c0_11, %c0_12, %c0_13] : memref<1x8x8xi32, #tpu.memory_space<vmem>>, vector<1x8x8xi32>
    %7 = vector.shape_cast %6 : vector<1x8x8xi32> to vector<8x8xi32>
    %cst = arith.constant dense<0.000000e+00> : vector<8x8xf32>
    %8 = tpu.matmul %1, %3, %cst {dimension_numbers = #tpu.dot_dimension_numbers<[1], [1], [0], [0], [0, 0, 1, 0], [], []>} : vector<8x8xf32>, vector<8x8xf32>, vector<8x8xf32> -> vector<8x8xf32>
    %cst_14 = arith.constant 0.353553385 : f32
    %9 = vector.broadcast %cst_14 : f32 to vector<8x8xf32>
    %10 = arith.mulf %8, %9 : vector<8x8xf32>
    %c0_i32 = arith.constant 0 : i32
    %11 = vector.broadcast %c0_i32 : i32 to vector<8x8xi32>
    %12 = arith.cmpi eq, %7, %11 : vector<8x8xi32>
    %cst_15 = arith.constant -1.000000e+09 : f32
    %13 = vector.broadcast %cst_15 : f32 to vector<8x8xf32>
    %14 = arith.select %12, %13, %10 : vector<8x8xi1>, vector<8x8xf32>
    %cst_16 = arith.constant dense<0xFF800000> : vector<8xf32>
    %15 = vector.multi_reduction <maximumf>, %14, %cst_16 [1] : vector<8x8xf32> to vector<8xf32>
    %16 = vector.shape_cast %15 : vector<8xf32> to vector<8x1xf32>
    %17 = vector.broadcast %16 : vector<8x1xf32> to vector<8x8xf32>
    %18 = arith.subf %14, %17 : vector<8x8xf32>
    %19 = math.exp %18 : vector<8x8xf32>
    %cst_17 = arith.constant dense<0.000000e+00> : vector<8xf32>
    %20 = vector.multi_reduction <add>, %19, %cst_17 [1] : vector<8x8xf32> to vector<8xf32>
    %21 = vector.shape_cast %20 : vector<8xf32> to vector<8x1xf32>
    %22 = vector.broadcast %21 : vector<8x1xf32> to vector<8x8xf32>
    %23 = arith.divf %19, %22 : vector<8x8xf32>
    %cst_18 = arith.constant dense<0.000000e+00> : vector<8x8xf32>
    %24 = tpu.matmul %23, %5, %cst_18 {dimension_numbers = #tpu.dot_dimension_numbers<[1], [0], [0], [1], [0, 0, 1, 1], [], []>} : vector<8x8xf32>, vector<8x8xf32>, vector<8x8xf32> -> vector<8x8xf32>
    %c0_19 = arith.constant 0 : index
    %c0_20 = arith.constant 0 : index
    %c0_21 = arith.constant 0 : index
    %c0_22 = arith.constant 0 : index
    %25 = vector.load %arg7[%c0_19, %c0_20, %c0_21, %c0_22] : memref<1x1x8x8xf32, #tpu.memory_space<vmem>>, vector<1x1x8x8xf32>
    %26 = vector.shape_cast %25 : vector<1x1x8x8xf32> to vector<8x8xf32>
    %27 = vector.shape_cast %24 : vector<8x8xf32> to vector<1x1x8x8xf32>
    tpu.vector_store %arg7[%c0_19, %c0_20, %c0_21, %c0_22], %27 {strides = array<i32>} : memref<1x1x8x8xf32, #tpu.memory_space<vmem>>, vector<1x1x8x8xf32>,
    return
  }
  func.func @transform_0(%arg0: i32, %arg1: i32, %arg2: i32) -> (i32, i32, i32, i32) {
    %c0_i32 = arith.constant 0 : i32
    %c0_i32_0 = arith.constant 0 : i32
    return %arg0, %arg1, %arg2, %c0_i32 : i32, i32, i32, i32
  }
  func.func @transform_1(%arg0: i32, %arg1: i32, %arg2: i32) -> (i32, i32, i32, i32) {
    %c0_i32 = arith.constant 0 : i32
    %c0_i32_0 = arith.constant 0 : i32
    %c0_i32_1 = arith.constant 0 : i32
    return %arg0, %arg1, %c0_i32, %c0_i32_0 : i32, i32, i32, i32
  }
  func.func @transform_2(%arg0: i32, %arg1: i32, %arg2: i32) -> (i32, i32, i32, i32) {
    %c0_i32 = arith.constant 0 : i32
    %c0_i32_0 = arith.constant 0 : i32
    %c0_i32_1 = arith.constant 0 : i32
    return %arg0, %arg1, %c0_i32, %c0_i32_0 : i32, i32, i32, i32
  }
  func.func @transform_3(%arg0: i32, %arg1: i32, %arg2: i32) -> (i32, i32, i32) {
    %c0_i32 = arith.constant 0 : i32
    %c0_i32_0 = arith.constant 0 : i32
    return %arg0, %arg2, %c0_i32 : i32, i32, i32
  }
  func.func @transform_4(%arg0: i32, %arg1: i32, %arg2: i32) -> (i32, i32, i32, i32) {
    %c0_i32 = arith.constant 0 : i32
    %c0_i32_0 = arith.constant 0 : i32
    return %arg0, %arg1, %arg2, %c0_i32 : i32, i32, i32, i32
  }
}

module attributes {stable_mosaic.version = 11 : i64} {
  func.func @_linear_kernel(%arg0: i32, %arg1: memref<16x32xf32, #tpu.memory_space<vmem>>, %arg2: memref<32x32xf32, #tpu.memory_space<vmem>>, %arg3: memref<1x32xf32, #tpu.memory_space<vmem>>, %arg4: memref<16x32xf32, #tpu.memory_space<vmem>>) attributes {dimension_semantics = [#tpu.dimension_semantics<parallel>], iteration_bounds = array<i64: 1>, scalar_prefetch = 0 : i64, scratch_operands = 0 : i64, tpu.core_type = #tpu.core_type<tc>, window_params = [{transform_indices = @transform_0, window_bounds = array<i64: 16, 32>}, {pipeline_mode = #tpu.pipeline_mode<synchronous>, transform_indices = @transform_1, window_bounds = array<i64: 32, 32>}, {pipeline_mode = #tpu.pipeline_mode<synchronous>, transform_indices = @transform_2, window_bounds = array<i64: 1, 32>}, {transform_indices = @transform_3, window_bounds = array<i64: 16, 32>}]} {
    %c0 = arith.constant 0 : index
    %c0_0 = arith.constant 0 : index
    %0 = vector.load %arg1[%c0, %c0_0] : memref<16x32xf32, #tpu.memory_space<vmem>>, vector<16x32xf32>
    %c0_1 = arith.constant 0 : index
    %c0_2 = arith.constant 0 : index
    %1 = vector.load %arg2[%c0_1, %c0_2] : memref<32x32xf32, #tpu.memory_space<vmem>>, vector<32x32xf32>
    %cst = arith.constant dense<0.000000e+00> : vector<16x32xf32>
    %2 = tpu.matmul %0, %1, %cst {dimension_numbers = #tpu.dot_dimension_numbers<[1], [0], [0], [1], [0, 0, 1, 1], [], []>} : vector<16x32xf32>, vector<32x32xf32>, vector<16x32xf32> -> vector<16x32xf32>
    %c0_3 = arith.constant 0 : index
    %c0_4 = arith.constant 0 : index
    %3 = vector.load %arg3[%c0_3, %c0_4] : memref<1x32xf32, #tpu.memory_space<vmem>>, vector<1x32xf32>
    %4 = vector.broadcast %3 : vector<1x32xf32> to vector<16x32xf32>
    %5 = arith.addf %2, %4 : vector<16x32xf32>
    %c0_5 = arith.constant 0 : index
    %c0_6 = arith.constant 0 : index
    %6 = vector.load %arg4[%c0_5, %c0_6] : memref<16x32xf32, #tpu.memory_space<vmem>>, vector<16x32xf32>
    tpu.vector_store %arg4[%c0_5, %c0_6], %5 {strides = array<i32>} : memref<16x32xf32, #tpu.memory_space<vmem>>, vector<16x32xf32>,
    return
  }
  func.func @transform_0(%arg0: i32) -> (i32, i32) {
    %c0_i32 = arith.constant 0 : i32
    %c0_i32_0 = arith.constant 0 : i32
    return %arg0, %c0_i32 : i32, i32
  }
  func.func @transform_1(%arg0: i32) -> (i32, i32) {
    %c0_i32 = arith.constant 0 : i32
    %c0_i32_0 = arith.constant 0 : i32
    %c0_i32_1 = arith.constant 0 : i32
    return %c0_i32, %c0_i32_0 : i32, i32
  }
  func.func @transform_2(%arg0: i32) -> (i32, i32) {
    %c0_i32 = arith.constant 0 : i32
    %c0_i32_0 = arith.constant 0 : i32
    %c0_i32_1 = arith.constant 0 : i32
    return %c0_i32, %c0_i32_0 : i32, i32
  }
  func.func @transform_3(%arg0: i32) -> (i32, i32) {
    %c0_i32 = arith.constant 0 : i32
    %c0_i32_0 = arith.constant 0 : i32
    return %arg0, %c0_i32 : i32, i32
  }
}

</mosaic_0001>

<llo_original>
// kernel: multi_head_attention.7
$region0: #{multi_head_attention.7}
  #allocation0 [shape = 'u32[]', space=smem, size = 0x4, offset = 0x4, fixed_abs, tag = 'smem constant byte address 0x4 - core index']
  #allocation1 [shape = 'u32[144,128]{1,0:T(1,128)}', space=vmem, size = 0x12000, scoped, tag = 'internal scratch']
  %s0 = inlined_call_operand.vmem [shape: f32[16,32], index: 0, kind: input, shape index: {}]
  %s1 = inlined_call_operand.vmem [shape: f32[32,32], index: 1, kind: input, shape index: {}]
  %s2 = inlined_call_operand.vmem [shape: f32[1,32], index: 2, kind: input, shape index: {}]
  %s3 = inlined_call_operand.vmem [shape: f32[16,32], index: 3, kind: output, shape index: {}]
  %s4 = sld [smem:[#allocation0]]
  $region22: #{multi_head_attention.7} parent=0
    _
  %s6 = ssub.s32 1, %s4
  %s7 = scalar_select 0, %s6, %s4
  // Predicated region
  $region2: #{multi_head_attention.7} parent=0 // pred_check
    _
  $region3: #{multi_head_attention.7} parent=0 // pred_check_branch
    %9 = sbr.rel (0) target = $region5
  $region4: #{multi_head_attention.7} parent=0 // pred_region
    _
  $region5: #{multi_head_attention.7} parent=0 // pred_fallthru
    _
  // Predicated region
  $region6: #{multi_head_attention.7} parent=0 // pred_check
    _
  $region7: #{multi_head_attention.7} parent=0 // pred_check_branch
    %11 = sbr.rel (0) target = $region9
  $region8: #{multi_head_attention.7} parent=0 // pred_region
    _
  $region9: #{multi_head_attention.7} parent=0 // pred_fallthru
    _
  // Predicated region
  $region10: #{multi_head_attention.7} parent=0 // pred_check
    _
  $region11: #{multi_head_attention.7} parent=0 // pred_check_branch
    %13 = sbr.rel (0) target = $region13
  $region12: #{multi_head_attention.7} parent=0 // pred_region
    _
  $region13: #{multi_head_attention.7} parent=0 // pred_fallthru
    _
  %v14 = vld [vmem:[%s0] sm:$0xff]
  %v15 = vld [vmem:[%s0 + $0x8] sm:$0xff]
  %v16 = vld [vmem:[%s1] sm:$0xff]
  %v17 = vld [vmem:[%s1 + $0x8] sm:$0xff]
  %v18 = vld [vmem:[%s1 + $0x10] sm:$0xff]
  %v19 = vld [vmem:[%s1 + $0x18] sm:$0xff]
  %v20 = vld [vmem:[%s2] sm:$0x1]
  %v22 = vlaneseq
  %v23 = vshrl.u32 %v22, 7
  %v24 = vsub.s32 0, %v23
  %v25 = vrot.slane %v20, %v24
  %vm27 = vcmask 261120
  %v29 = vsel %vm27, %v14, 0
  %v32 = vsel %vm27, %v15, 0
  %34 = vmatprep.subr.mxu0 0.0
  %35 = vmatpush1.msra.mxu0 0.0
  %36 = vmatprep.subr.mxu0 0.0
  %37 = vmatpush1.msra.mxu0 0.0
  %38 = vmatprep.subr.mxu0 0.0
  %39 = vmatpush1.msra.mxu0 0.0
  %40 = vmatprep.subr.mxu0 0.0
  %41 = vmatpush1.msra.mxu0 0.0
  %42 = vmatprep.subr.mxu0 0.0
  %43 = vmatpush1.msra.mxu0 0.0
  %44 = vmatprep.subr.mxu0 0.0
  %45 = vmatpush1.msra.mxu0 0.0
  %46 = vmatprep.subr.mxu0 0.0
  %47 = vmatpush1.msra.mxu0 0.0
  %48 = vmatprep.subr.mxu0 0.0
  %49 = vmatpush1.msra.mxu0 0.0
  %50 = vmatprep.subr.mxu0 0.0
  %51 = vmatpush1.msra.mxu0 0.0
  %52 = vmatprep.subr.mxu0 0.0
  %53 = vmatpush1.msra.mxu0 0.0
  %54 = vmatprep.subr.mxu0 0.0
  %55 = vmatpush1.msra.mxu0 0.0
  %56 = vmatprep.subr.mxu0 0.0
  %57 = vmatpush1.msra.mxu0 0.0
  %58 = vmatprep.subr.mxu0 0.0
  %59 = vmatpush1.msra.mxu0 %v19
  %60 = vmatprep.subr.mxu0 0.0
  %61 = vmatpush1.msra.mxu0 %v18
  %62 = vmatprep.subr.mxu0 0.0
  %63 = vmatpush1.msra.mxu0 %v17
  %64 = vmatprep.subr.mxu0 0.0
  %65 = vmatpush1.msra.mxu0 %v16
  %66 = vmatprep.subr.mxu0 0.0
  %67 = vmatpush2.msra.mxu0 0.0
  %68 = vmatprep.subr.mxu0 0.0
  %69 = vmatpush2.msra.mxu0 0.0
  %70 = vmatprep.subr.mxu0 0.0
  %71 = vmatpush2.msra.mxu0 0.0
  %72 = vmatprep.subr.mxu0 0.0
  %73 = vmatpush2.msra.mxu0 0.0
  %74 = vmatprep.subr.mxu0 0.0
  %75 = vmatpush2.msra.mxu0 0.0
  %76 = vmatprep.subr.mxu0 0.0
  %77 = vmatpush2.msra.mxu0 0.0
  %78 = vmatprep.subr.mxu0 0.0
  %79 = vmatpush2.msra.mxu0 0.0
  %80 = vmatprep.subr.mxu0 0.0
  %81 = vmatpush2.msra.mxu0 0.0
  %82 = vmatprep.subr.mxu0 0.0
  %83 = vmatpush2.msra.mxu0 0.0
  %84 = vmatprep.subr.mxu0 0.0
  %85 = vmatpush2.msra.mxu0 0.0
  %86 = vmatprep.subr.mxu0 0.0
  %87 = vmatpush2.msra.mxu0 0.0
  %88 = vmatprep.subr.mxu0 0.0
  %89 = vmatpush2.msra.mxu0 0.0
  %90 = vmatprep.subr.mxu0 0.0
  %91 = vmatpush2.msra.mxu0 0.0
  %92 = vmatprep.subr.mxu0 0.0
  %93 = vmatpush2.msra.mxu0 0.0
  %94 = vmatprep.subr.mxu0 0.0
  %95 = vmatpush2.msra.mxu0 0.0
  %96 = vmatprep.subr.mxu0 0.0
  %97 = vmatpush2.msra.mxu0 0.0
  %98 = vmatprep.mubr.f32.mxu0 0.0
  %99 = vmatmul.mubr.f32.gmra.mxu0 %v29
  %v100 = vpop.f32.mrf.mxu0
  %v101 = vadd.f32 %v25, %v100
  %v102 = vpop.f32.mrf.mxu0
  %103 = vmatprep.mubr.f32.mxu0 0.0
  %104 = vmatmul.mubr.f32.gmra.mxu0 %v32
  %v105 = vpop.f32.mrf.mxu0
  %v106 = vadd.f32 %v25, %v105
  %v107 = vpop.f32.mrf.mxu0
  %108 = vdwg.mxu0
  %109 = vst.msk [vmem:[%s3] sm:$0xff] %vm27, %v101
  %110 = vst.msk [vmem:[%s3 + $0x8] sm:$0xff] %vm27, %v106
  // Predicated region
  $region14: #{multi_head_attention.7} parent=0 // pred_check
    _
  $region15: #{multi_head_attention.7} parent=0 // pred_check_branch
    %112 = sbr.rel (0) target = $region17
  $region16: #{multi_head_attention.7} parent=0 // pred_region
    _
  $region17: #{multi_head_attention.7} parent=0 // pred_fallthru
    _
  // Predicated region
  $region18: #{multi_head_attention.7} parent=0 // pred_check
    _
  $region19: #{multi_head_attention.7} parent=0 // pred_check_branch
    %114 = sbr.rel (0) target = $region21
  $region20: #{multi_head_attention.7} parent=0 // pred_region
    _
  $region21: #{multi_head_attention.7} parent=0 // pred_fallthru
    _

// kernel: multi_head_attention.6
$region0: #{multi_head_attention.6}
  #allocation0 [shape = 'u32[]', space=smem, size = 0x4, offset = 0x4, fixed_abs, tag = 'smem constant byte address 0x4 - core index']
  #allocation1 [shape = 'u32[144,128]{1,0:T(1,128)}', space=vmem, size = 0x12000, scoped, tag = 'internal scratch']
  %s0 = inlined_call_operand.vmem [shape: f32[16,32], index: 0, kind: input, shape index: {}]
  %s1 = inlined_call_operand.hbm [shape: f32[32,32], index: 1, kind: input, shape index: {}]
  %s2 = inlined_call_operand.vmem [shape: f32[1,32], index: 2, kind: input, shape index: {}]
  %s3 = inlined_call_operand.vmem [shape: f32[16,32], index: 3, kind: output, shape index: {}]
  %s4 = sld [smem:[#allocation0]]
  $region26: #{multi_head_attention.6} parent=0
    _
  %s6 = ssub.s32 1, %s4
  %s7 = scalar_select 0, %s6, %s4
  $region1: #{multi_head_attention.6} parent=0
    #allocation2 [shape = 'u8[16384]{0}', space=vmem, size = 0x4000, scoped, tag = 'input window, operand 1, single buffered']
    #allocation3 [shape = 's32[1]{0}', space=sflag, size = 0x4, scoped, tag = 'scoped memory for multi_head_attention.6']
    %8 = vsyncpa [#allocation3], 0
    // Predicated region
    $region2: #{multi_head_attention.6} parent=1 // pred_check
      _
    $region3: #{multi_head_attention.6} parent=1 // pred_check_branch
      %10 = sbr.rel (0) target = $region5
    $region4: #{multi_head_attention.6} parent=1 // pred_region
      _
    $region5: #{multi_head_attention.6} parent=1 // pred_fallthru
      _
    // Predicated region
    $region6: #{multi_head_attention.6} parent=1 // pred_check
      _
    $region7: #{multi_head_attention.6} parent=1 // pred_check_branch
      %12 = sbr.rel (0) target = $region9
    $region8: #{multi_head_attention.6} parent=1 // pred_region
      %s14 = ssub.s32 512, 512
      %15 = vsyncadd [#allocation3], %s14
      %s16 = sshll.u32 [#allocation2], 4
      %s17 = int_to_ptr.vmem [resolvable:$true] %s16
      %22 = dma.hbm_to_vmem [thread:$0]  %s1, 512, %s17, [#allocation3], 128, 128, 8
    $region9: #{multi_head_attention.6} parent=1 // pred_fallthru
      _
    // Predicated region
    $region10: #{multi_head_attention.6} parent=1 // pred_check
      _
    $region11: #{multi_head_attention.6} parent=1 // pred_check_branch
      %24 = sbr.rel (0) target = $region13
    $region12: #{multi_head_attention.6} parent=1 // pred_region
      _
    $region13: #{multi_head_attention.6} parent=1 // pred_fallthru
      _
    // Predicated region
    $region14: #{multi_head_attention.6} parent=1 // pred_check
      _
    $region15: #{multi_head_attention.6} parent=1 // pred_check_branch
      %26 = sbr.rel (0) target = $region17
    $region16: #{multi_head_attention.6} parent=1 // pred_region
      %27 = dma.done [#allocation3], 512
    $region17: #{multi_head_attention.6} parent=1 // pred_fallthru
      _
    %v28 = vld [vmem:[%s0] sm:$0xff]
    %v29 = vld [vmem:[%s0 + $0x8] sm:$0xff]
    %v30 = vld [vmem:[#allocation2] sm:$0xff]
    %v31 = vld [vmem:[#allocation2 + $0x8] sm:$0xff]
    %v32 = vld [vmem:[#allocation2 + $0x10] sm:$0xff]
    %v33 = vld [vmem:[#allocation2 + $0x18] sm:$0xff]
    %v34 = vld [vmem:[%s2] sm:$0x1]
    %v36 = vlaneseq
    %v37 = vshrl.u32 %v36, 7
    %v38 = vsub.s32 0, %v37
    %v39 = vrot.slane %v34, %v38
    %vm41 = vcmask 261120
    %v43 = vsel %vm41, %v28, 0
    %v46 = vsel %vm41, %v29, 0
    %48 = vmatprep.subr.mxu0 0.0
    %49 = vmatpush1.msra.mxu0 0.0
    %50 = vmatprep.subr.mxu0 0.0
    %51 = vmatpush1.msra.mxu0 0.0
    %52 = vmatprep.subr.mxu0 0.0
    %53 = vmatpush1.msra.mxu0 0.0
    %54 = vmatprep.subr.mxu0 0.0
    %55 = vmatpush1.msra.mxu0 0.0
    %56 = vmatprep.subr.mxu0 0.0
    %57 = vmatpush1.msra.mxu0 0.0
    %58 = vmatprep.subr.mxu0 0.0
    %59 = vmatpush1.msra.mxu0 0.0
    %60 = vmatprep.subr.mxu0 0.0
    %61 = vmatpush1.msra.mxu0 0.0
    %62 = vmatprep.subr.mxu0 0.0
    %63 = vmatpush1.msra.mxu0 0.0
    %64 = vmatprep.subr.mxu0 0.0
    %65 = vmatpush1.msra.mxu0 0.0
    %66 = vmatprep.subr.mxu0 0.0
    %67 = vmatpush1.msra.mxu0 0.0
    %68 = vmatprep.subr.mxu0 0.0
    %69 = vmatpush1.msra.mxu0 0.0
    %70 = vmatprep.subr.mxu0 0.0
    %71 = vmatpush1.msra.mxu0 0.0
    %72 = vmatprep.subr.mxu0 0.0
    %73 = vmatpush1.msra.mxu0 %v33
    %74 = vmatprep.subr.mxu0 0.0
    %75 = vmatpush1.msra.mxu0 %v32
    %76 = vmatprep.subr.mxu0 0.0
    %77 = vmatpush1.msra.mxu0 %v31
    %78 = vmatprep.subr.mxu0 0.0
    %79 = vmatpush1.msra.mxu0 %v30
    %80 = vmatprep.subr.mxu0 0.0
    %81 = vmatpush2.msra.mxu0 0.0
    %82 = vmatprep.subr.mxu0 0.0
    %83 = vmatpush2.msra.mxu0 0.0
    %84 = vmatprep.subr.mxu0 0.0
    %85 = vmatpush2.msra.mxu0 0.0
    %86 = vmatprep.subr.mxu0 0.0
    %87 = vmatpush2.msra.mxu0 0.0
    %88 = vmatprep.subr.mxu0 0.0
    %89 = vmatpush2.msra.mxu0 0.0
    %90 = vmatprep.subr.mxu0 0.0
    %91 = vmatpush2.msra.mxu0 0.0
    %92 = vmatprep.subr.mxu0 0.0
    %93 = vmatpush2.msra.mxu0 0.0
    %94 = vmatprep.subr.mxu0 0.0
    %95 = vmatpush2.msra.mxu0 0.0
    %96 = vmatprep.subr.mxu0 0.0
    %97 = vmatpush2.msra.mxu0 0.0
    %98 = vmatprep.subr.mxu0 0.0
    %99 = vmatpush2.msra.mxu0 0.0
    %100 = vmatprep.subr.mxu0 0.0
    %101 = vmatpush2.msra.mxu0 0.0
    %102 = vmatprep.subr.mxu0 0.0
    %103 = vmatpush2.msra.mxu0 0.0
    %104 = vmatprep.subr.mxu0 0.0
    %105 = vmatpush2.msra.mxu0 0.0
    %106 = vmatprep.subr.mxu0 0.0
    %107 = vmatpush2.msra.mxu0 0.0
    %108 = vmatprep.subr.mxu0 0.0
    %109 = vmatpush2.msra.mxu0 0.0
    %110 = vmatprep.subr.mxu0 0.0
    %111 = vmatpush2.msra.mxu0 0.0
    %112 = vmatprep.mubr.f32.mxu0 0.0
    %113 = vmatmul.mubr.f32.gmra.mxu0 %v43
    %v114 = vpop.f32.mrf.mxu0
    %v115 = vadd.f32 %v39, %v114
    %v116 = vpop.f32.mrf.mxu0
    %117 = vmatprep.mubr.f32.mxu0 0.0
    %118 = vmatmul.mubr.f32.gmra.mxu0 %v46
    %v119 = vpop.f32.mrf.mxu0
    %v120 = vadd.f32 %v39, %v119
    %v121 = vpop.f32.mrf.mxu0
    %122 = vdwg.mxu0
    %123 = vst.msk [vmem:[%s3] sm:$0xff] %vm41, %v115
    %124 = vst.msk [vmem:[%s3 + $0x8] sm:$0xff] %vm41, %v120
    // Predicated region
    $region18: #{multi_head_attention.6} parent=1 // pred_check
      _
    $region19: #{multi_head_attention.6} parent=1 // pred_check_branch
      %126 = sbr.rel (0) target = $region21
    $region20: #{multi_head_attention.6} parent=1 // pred_region
      _
    $region21: #{multi_head_attention.6} parent=1 // pred_fallthru
      _
    // Predicated region
    $region22: #{multi_head_attention.6} parent=1 // pred_check
      _
    $region23: #{multi_head_attention.6} parent=1 // pred_check_branch
      %128 = sbr.rel (0) target = $region25
    $region24: #{multi_head_attention.6} parent=1 // pred_region
      _
    $region25: #{multi_head_attention.6} parent=1 // pred_fallthru
      _
    %129 = vsyncpa [#allocation3], 1

// kernel: multi_head_attention.9
$region0: #{multi_head_attention.9}
  #allocation0 [shape = 'u32[]', space=smem, size = 0x4, offset = 0x4, fixed_abs, tag = 'smem constant byte address 0x4 - core index']
  #allocation1 [shape = 'u32[144,128]{1,0:T(1,128)}', space=vmem, size = 0x12000, scoped, tag = 'internal scratch']
  %s0 = inlined_call_operand.vmem [shape: f32[16,32], index: 0, kind: input, shape index: {}]
  %s1 = inlined_call_operand.vmem [shape: f32[32,32], index: 1, kind: input, shape index: {}]
  %s2 = inlined_call_operand.vmem [shape: f32[1,32], index: 2, kind: input, shape index: {}]
  %s3 = inlined_call_operand.hbm [shape: f32[16,32], index: 3, kind: output, shape index: {}]
  %s4 = sld [smem:[#allocation0]]
  $region22: #{multi_head_attention.9} parent=0
    _
  %s6 = ssub.s32 1, %s4
  %s7 = scalar_select 0, %s6, %s4
  $region1: #{multi_head_attention.9} parent=0
    #allocation2 [shape = 'u8[8192]{0}', space=vmem, size = 0x2000, scoped, tag = 'output window, operand 0, single buffered']
    #allocation3 [shape = 's32[1]{0}', space=sflag, size = 0x4, scoped, tag = 'scoped memory for multi_head_attention.9']
    %8 = vsyncpa [#allocation3], 0
    // Predicated region
    $region2: #{multi_head_attention.9} parent=1 // pred_check
      _
    $region3: #{multi_head_attention.9} parent=1 // pred_check_branch
      %10 = sbr.rel (0) target = $region5
    $region4: #{multi_head_attention.9} parent=1 // pred_region
      _
    $region5: #{multi_head_attention.9} parent=1 // pred_fallthru
      _
    // Predicated region
    $region6: #{multi_head_attention.9} parent=1 // pred_check
      _
    $region7: #{multi_head_attention.9} parent=1 // pred_check_branch
      %12 = sbr.rel (0) target = $region9
    $region8: #{multi_head_attention.9} parent=1 // pred_region
      _
    $region9: #{multi_head_attention.9} parent=1 // pred_fallthru
      _
    // Predicated region
    $region10: #{multi_head_attention.9} parent=1 // pred_check
      _
    $region11: #{multi_head_attention.9} parent=1 // pred_check_branch
      %14 = sbr.rel (0) target = $region13
    $region12: #{multi_head_attention.9} parent=1 // pred_region
      _
    $region13: #{multi_head_attention.9} parent=1 // pred_fallthru
      _
    %v15 = vld [vmem:[%s0] sm:$0xff]
    %v16 = vld [vmem:[%s0 + $0x8] sm:$0xff]
    %v17 = vld [vmem:[%s1] sm:$0xff]
    %v18 = vld [vmem:[%s1 + $0x8] sm:$0xff]
    %v19 = vld [vmem:[%s1 + $0x10] sm:$0xff]
    %v20 = vld [vmem:[%s1 + $0x18] sm:$0xff]
    %v21 = vld [vmem:[%s2] sm:$0x1]
    %v23 = vlaneseq
    %v24 = vshrl.u32 %v23, 7
    %v25 = vsub.s32 0, %v24
    %v26 = vrot.slane %v21, %v25
    %vm28 = vcmask 261120
    %v30 = vsel %vm28, %v15, 0
    %v33 = vsel %vm28, %v16, 0
    %35 = vmatprep.subr.mxu0 0.0
    %36 = vmatpush1.msra.mxu0 0.0
    %37 = vmatprep.subr.mxu0 0.0
    %38 = vmatpush1.msra.mxu0 0.0
    %39 = vmatprep.subr.mxu0 0.0
    %40 = vmatpush1.msra.mxu0 0.0
    %41 = vmatprep.subr.mxu0 0.0
    %42 = vmatpush1.msra.mxu0 0.0
    %43 = vmatprep.subr.mxu0 0.0
    %44 = vmatpush1.msra.mxu0 0.0
    %45 = vmatprep.subr.mxu0 0.0
    %46 = vmatpush1.msra.mxu0 0.0
    %47 = vmatprep.subr.mxu0 0.0
    %48 = vmatpush1.msra.mxu0 0.0
    %49 = vmatprep.subr.mxu0 0.0
    %50 = vmatpush1.msra.mxu0 0.0
    %51 = vmatprep.subr.mxu0 0.0
    %52 = vmatpush1.msra.mxu0 0.0
    %53 = vmatprep.subr.mxu0 0.0
    %54 = vmatpush1.msra.mxu0 0.0
    %55 = vmatprep.subr.mxu0 0.0
    %56 = vmatpush1.msra.mxu0 0.0
    %57 = vmatprep.subr.mxu0 0.0
    %58 = vmatpush1.msra.mxu0 0.0
    %59 = vmatprep.subr.mxu0 0.0
    %60 = vmatpush1.msra.mxu0 %v20
    %61 = vmatprep.subr.mxu0 0.0
    %62 = vmatpush1.msra.mxu0 %v19
    %63 = vmatprep.subr.mxu0 0.0
    %64 = vmatpush1.msra.mxu0 %v18
    %65 = vmatprep.subr.mxu0 0.0
    %66 = vmatpush1.msra.mxu0 %v17
    %67 = vmatprep.subr.mxu0 0.0
    %68 = vmatpush2.msra.mxu0 0.0
    %69 = vmatprep.subr.mxu0 0.0
    %70 = vmatpush2.msra.mxu0 0.0
    %71 = vmatprep.subr.mxu0 0.0
    %72 = vmatpush2.msra.mxu0 0.0
    %73 = vmatprep.subr.mxu0 0.0
    %74 = vmatpush2.msra.mxu0 0.0
    %75 = vmatprep.subr.mxu0 0.0
    %76 = vmatpush2.msra.mxu0 0.0
    %77 = vmatprep.subr.mxu0 0.0
    %78 = vmatpush2.msra.mxu0 0.0
    %79 = vmatprep.subr.mxu0 0.0
    %80 = vmatpush2.msra.mxu0 0.0
    %81 = vmatprep.subr.mxu0 0.0
    %82 = vmatpush2.msra.mxu0 0.0
    %83 = vmatprep.subr.mxu0 0.0
    %84 = vmatpush2.msra.mxu0 0.0
    %85 = vmatprep.subr.mxu0 0.0
    %86 = vmatpush2.msra.mxu0 0.0
    %87 = vmatprep.subr.mxu0 0.0
    %88 = vmatpush2.msra.mxu0 0.0
    %89 = vmatprep.subr.mxu0 0.0
    %90 = vmatpush2.msra.mxu0 0.0
    %91 = vmatprep.subr.mxu0 0.0
    %92 = vmatpush2.msra.mxu0 0.0
    %93 = vmatprep.subr.mxu0 0.0
    %94 = vmatpush2.msra.mxu0 0.0
    %95 = vmatprep.subr.mxu0 0.0
    %96 = vmatpush2.msra.mxu0 0.0
    %97 = vmatprep.subr.mxu0 0.0
    %98 = vmatpush2.msra.mxu0 0.0
    %99 = vmatprep.mubr.f32.mxu0 0.0
    %100 = vmatmul.mubr.f32.gmra.mxu0 %v30
    %v101 = vpop.f32.mrf.mxu0
    %v102 = vadd.f32 %v26, %v101
    %v103 = vpop.f32.mrf.mxu0
    %104 = vmatprep.mubr.f32.mxu0 0.0
    %105 = vmatmul.mubr.f32.gmra.mxu0 %v33
    %v106 = vpop.f32.mrf.mxu0
    %v107 = vadd.f32 %v26, %v106
    %v108 = vpop.f32.mrf.mxu0
    %109 = vdwg.mxu0
    %110 = vst.msk [vmem:[#allocation2] sm:$0xff] %vm28, %v102
    %111 = vst.msk [vmem:[#allocation2 + $0x8] sm:$0xff] %vm28, %v107
    // Predicated region
    $region14: #{multi_head_attention.9} parent=1 // pred_check
      _
    $region15: #{multi_head_attention.9} parent=1 // pred_check_branch
      %113 = sbr.rel (0) target = $region17
    $region16: #{multi_head_attention.9} parent=1 // pred_region
      %s115 = ssub.s32 256, 256
      %116 = vsyncadd [#allocation3], %s115
      %s117 = sshll.u32 [#allocation2], 4
      %s118 = int_to_ptr.vmem [resolvable:$true] %s117
      %123 = dma.vmem_to_hbm [thread:$0]  %s118, 256, %s3, [#allocation3], 128, 128, 8
    $region17: #{multi_head_attention.9} parent=1 // pred_fallthru
      _
    // Predicated region
    $region18: #{multi_head_attention.9} parent=1 // pred_check
      _
    $region19: #{multi_head_attention.9} parent=1 // pred_check_branch
      %125 = sbr.rel (0) target = $region21
    $region20: #{multi_head_attention.9} parent=1 // pred_region
      %126 = dma.done [#allocation3], 256
    $region21: #{multi_head_attention.9} parent=1 // pred_fallthru
      _
    %127 = vsyncpa [#allocation3], 1

// kernel: multi_head_attention.8
$region0: #{multi_head_attention.8}
  #allocation0 [shape = 'u32[]', space=smem, size = 0x4, offset = 0x4, fixed_abs, tag = 'smem constant byte address 0x4 - core index']
  #allocation1 [shape = 'u32[144,128]{1,0:T(1,128)}', space=vmem, size = 0x12000, scoped, tag = 'internal scratch']
  %s0 = inlined_call_operand.vmem [shape: f32[2,4,8,8], index: 0, kind: input, shape index: {}]
  %s1 = inlined_call_operand.vmem [shape: f32[2,4,8,8], index: 1, kind: input, shape index: {}]
  %s2 = inlined_call_operand.vmem [shape: f32[2,4,8,8], index: 2, kind: input, shape index: {}]
  %s3 = inlined_call_operand.vmem [shape: s32[2,8,8], index: 3, kind: input, shape index: {}]
  %s4 = inlined_call_operand.vmem [shape: f32[2,4,8,8], index: 4, kind: output, shape index: {}]
  %s5 = sld [smem:[#allocation0]]
  $region49: #{multi_head_attention.8} parent=0
    _
  %s7 = ssub.s32 1, %s5
  %s8 = scalar_select 0, %s7, %s5
  loop: start=0, step=1, limit=10
  $region2: #{multi_head_attention.8} parent=0 // loop_pre_header
    _
  $region3: #{multi_head_attention.8} parent=0 // loop_header
    %s10 = sphi 0, %s14
    %p11 = scmp.ge.s32.totalorder %s10, 10
    %s17 = sphi 0, %s36
    %s18 = sphi 0, %s32
    %s19 = sphi 0, %s28
    %s20 = sphi 0, %s17
    %s21 = sphi 0, %s18
    %s22 = sphi 0, %s19
    %s23 = sphi 0, %s20
    %s24 = sphi 0, %s21
    %s25 = sphi 0, %s22
    %s43 = sphi 0, %s45
    %s46 = sphi 0, %s43
    %s47 = sphi 0, %s46
    %s63 = sphi 0, %s47
    %s71 = sphi 0, %s73
    %s74 = sphi 0, %s71
    %s75 = sphi 0, %s74
    %s91 = sphi 0, %s75
    %s99 = sphi 0, %s101
    %s102 = sphi 0, %s99
    %s103 = sphi 0, %s102
    %s119 = sphi 0, %s103
    %s127 = sphi 0, %s129
    %s130 = sphi 0, %s127
    %s131 = sphi 0, %s130
    %s147 = sphi 0, %s131
    %s157 = sphi 0, %s159
    %s160 = sphi 0, %s157
    %s161 = sphi 0, %s160
    %s177 = sphi 0, %s161
  $region4: #{multi_head_attention.8} parent=0 // loop_header_branch
    %13 = sbr.rel (%p11) target = $region8
  $region5: #{multi_head_attention.8} parent=0 // loop_body
    %s15 = ssub.s32 %s10, 1
    %s16 = ssub.s32 %s10, 2
    %s26 = sadd.s32 1, %s19
    %p27 = scmp.ge.s32.totalorder %s26, 1
    %s28 = scalar_select %p27, 0, %s26
    %s29 = sadd.s32 1, %s18
    %s30 = scalar_select %p27, %s29, %s18
    %p31 = scmp.ge.s32.totalorder %s30, 4
    %s32 = scalar_select %p31, 0, %s30
    %s33 = sadd.s32 1, %s17
    %s34 = scalar_select %p31, %s33, %s17
    %p35 = scmp.ge.s32.totalorder %s34, 2
    %s36 = scalar_select %p35, 0, %s34
    %s37 = ssub.s32 %s17, %s36
    %s38 = ssub.s32 %s18, %s32
    %s39 = sor.u32 %s37, %s38
    %s40 = ssub.s32 %s19, %s28
    %s41 = sor.u32 %s39, %s40
    %p42 = scmp.eq.s32.totalorder %s41, 0
    %s44 = sadd.s32 %s43, 1
    %s45 = scalar_select %p42, %s43, %s44
    %p48 = pneg %p42
    %p49 = scmp.eq.s32.totalorder %s10, 7
    %p50 = por %p48, %p49
    %p51 = scmp.ne.s32.totalorder %s43, %s46
    %p52 = scmp.eq.s32.totalorder %s10, 0
    %p53 = por %p51, %p52
    %p54 = scmp.ne.s32.totalorder %s43, %s46
    %p55 = scmp.eq.s32.totalorder %s15, 7
    %p56 = por %p54, %p55
    %p57 = scmp.ne.s32.totalorder %s46, %s47
    %p58 = scmp.eq.s32.totalorder %s15, 0
    %p59 = por %p57, %p58
    %p60 = scmp.ne.s32.totalorder %s46, %s47
    %p61 = scmp.eq.s32.totalorder %s16, 7
    %p62 = por %p60, %p61
    %p64 = scmp.ne.s32.totalorder %s47, %s63
    %p65 = scmp.eq.s32.totalorder %s16, 0
    %p66 = por %p64, %p65
    %s67 = ssub.s32 %s17, %s36
    %s68 = ssub.s32 %s18, %s32
    %s69 = sor.u32 %s67, %s68
    %p70 = scmp.eq.s32.totalorder %s69, 0
    %s72 = sadd.s32 %s71, 1
    %s73 = scalar_select %p70, %s71, %s72
    %p76 = pneg %p70
    %p77 = scmp.eq.s32.totalorder %s10, 7
    %p78 = por %p76, %p77
    %p79 = scmp.ne.s32.totalorder %s71, %s74
    %p80 = scmp.eq.s32.totalorder %s10, 0
    %p81 = por %p79, %p80
    %p82 = scmp.ne.s32.totalorder %s71, %s74
    %p83 = scmp.eq.s32.totalorder %s15, 7
    %p84 = por %p82, %p83
    %p85 = scmp.ne.s32.totalorder %s74, %s75
    %p86 = scmp.eq.s32.totalorder %s15, 0
    %p87 = por %p85, %p86
    %p88 = scmp.ne.s32.totalorder %s74, %s75
    %p89 = scmp.eq.s32.totalorder %s16, 7
    %p90 = por %p88, %p89
    %p92 = scmp.ne.s32.totalorder %s75, %s91
    %p93 = scmp.eq.s32.totalorder %s16, 0
    %p94 = por %p92, %p93
    %s95 = ssub.s32 %s17, %s36
    %s96 = ssub.s32 %s18, %s32
    %s97 = sor.u32 %s95, %s96
    %p98 = scmp.eq.s32.totalorder %s97, 0
    %s100 = sadd.s32 %s99, 1
    %s101 = scalar_select %p98, %s99, %s100
    %p104 = pneg %p98
    %p105 = scmp.eq.s32.totalorder %s10, 7
    %p106 = por %p104, %p105
    %p107 = scmp.ne.s32.totalorder %s99, %s102
    %p108 = scmp.eq.s32.totalorder %s10, 0
    %p109 = por %p107, %p108
    %p110 = scmp.ne.s32.totalorder %s99, %s102
    %p111 = scmp.eq.s32.totalorder %s15, 7
    %p112 = por %p110, %p111
    %p113 = scmp.ne.s32.totalorder %s102, %s103
    %p114 = scmp.eq.s32.totalorder %s15, 0
    %p115 = por %p113, %p114
    %p116 = scmp.ne.s32.totalorder %s102, %s103
    %p117 = scmp.eq.s32.totalorder %s16, 7
    %p118 = por %p116, %p117
    %p120 = scmp.ne.s32.totalorder %s103, %s119
    %p121 = scmp.eq.s32.totalorder %s16, 0
    %p122 = por %p120, %p121
    %s123 = ssub.s32 %s17, %s36
    %s124 = ssub.s32 %s19, %s28
    %s125 = sor.u32 %s123, %s124
    %p126 = scmp.eq.s32.totalorder %s125, 0
    %s128 = sadd.s32 %s127, 1
    %s129 = scalar_select %p126, %s127, %s128
    %p132 = pneg %p126
    %p133 = scmp.eq.s32.totalorder %s10, 7
    %p134 = por %p132, %p133
    %p135 = scmp.ne.s32.totalorder %s127, %s130
    %p136 = scmp.eq.s32.totalorder %s10, 0
    %p137 = por %p135, %p136
    %p138 = scmp.ne.s32.totalorder %s127, %s130
    %p139 = scmp.eq.s32.totalorder %s15, 7
    %p140 = por %p138, %p139
    %p141 = scmp.ne.s32.totalorder %s130, %s131
    %p142 = scmp.eq.s32.totalorder %s15, 0
    %p143 = por %p141, %p142
    %p144 = scmp.ne.s32.totalorder %s130, %s131
    %p145 = scmp.eq.s32.totalorder %s16, 7
    %p146 = por %p144, %p145
    %p148 = scmp.ne.s32.totalorder %s131, %s147
    %p149 = scmp.eq.s32.totalorder %s16, 0
    %p150 = por %p148, %p149
    %s151 = ssub.s32 %s17, %s36
    %s152 = ssub.s32 %s18, %s32
    %s153 = sor.u32 %s151, %s152
    %s154 = ssub.s32 %s19, %s28
    %s155 = sor.u32 %s153, %s154
    %p156 = scmp.eq.s32.totalorder %s155, 0
    %s158 = sadd.s32 %s157, 1
    %s159 = scalar_select %p156, %s157, %s158
    %p162 = pneg %p156
    %p163 = scmp.eq.s32.totalorder %s10, 7
    %p164 = por %p162, %p163
    %p165 = scmp.ne.s32.totalorder %s157, %s160
    %p166 = scmp.eq.s32.totalorder %s10, 0
    %p167 = por %p165, %p166
    %p168 = scmp.ne.s32.totalorder %s157, %s160
    %p169 = scmp.eq.s32.totalorder %s15, 7
    %p170 = por %p168, %p169
    %p171 = scmp.ne.s32.totalorder %s160, %s161
    %p172 = scmp.eq.s32.totalorder %s15, 0
    %p173 = por %p171, %p172
    %p174 = scmp.ne.s32.totalorder %s160, %s161
    %p175 = scmp.eq.s32.totalorder %s16, 7
    %p176 = por %p174, %p175
    %p178 = scmp.ne.s32.totalorder %s161, %s177
    %p179 = scmp.eq.s32.totalorder %s16, 0
    %p180 = por %p178, %p179
    %p181 = scmp.le.s32.totalorder 1, %s10
    %p182 = scmp.lt.s32.totalorder %s10, 9
    %p183 = pnand %p181, %p182
    %p184 = pneg %p183
    // Predicated region
    $region9: #{multi_head_attention.8} parent=5 // pred_check
      _
    $region10: #{multi_head_attention.8} parent=5 // pred_check_branch
      %186 = sbr.rel (%p183) target = $region12
    $region11: #{multi_head_attention.8} parent=5 // pred_region
      %s187 = ssub.s32 %s10, 1
    $region12: #{multi_head_attention.8} parent=5 // pred_fallthru
      _
    %p188 = scmp.lt.s32.totalorder %s10, 8
    // Predicated region
    $region13: #{multi_head_attention.8} parent=5 // pred_check
      %p189 = pneg %p188
    $region14: #{multi_head_attention.8} parent=5 // pred_check_branch
      %191 = sbr.rel (%p189) target = $region16
    $region15: #{multi_head_attention.8} parent=5 // pred_region
      // Predicated region
      $region17: #{multi_head_attention.8} parent=15 // pred_check
        %p192 = pneg %p53
      $region18: #{multi_head_attention.8} parent=15 // pred_check_branch
        %194 = sbr.rel (%p192) target = $region20
      $region19: #{multi_head_attention.8} parent=15 // pred_region
        %p195 = scmp.lt.s32.totalorder %s17, 1
        %s196 = scalar_select %p195, %s17, 1
        %p197 = scmp.lt.s32.totalorder %s18, 3
        %s198 = scalar_select %p197, %s18, 3
        %p199 = scmp.lt.s32.totalorder %s19, 0
        %s200 = scalar_select %p199, %s19, 0
        %s201 = sadd.s32 %s200, %s198
        %s202 = smul.addr %s196, 4
        %s203 = sadd.s32 %s201, %s202
        %s204 = smul.addr %s203, 8
        %s205 = scalar_lea.vmem %s0, %s204
      $region20: #{multi_head_attention.8} parent=15 // pred_fallthru
        _
      // Predicated region
      $region21: #{multi_head_attention.8} parent=15 // pred_check
        %p206 = pneg %p81
      $region22: #{multi_head_attention.8} parent=15 // pred_check_branch
        %208 = sbr.rel (%p206) target = $region24
      $region23: #{multi_head_attention.8} parent=15 // pred_region
        %p209 = scmp.lt.s32.totalorder %s17, 1
        %s210 = scalar_select %p209, %s17, 1
        %p211 = scmp.lt.s32.totalorder %s18, 3
        %s212 = scalar_select %p211, %s18, 3
        %s213 = smul.addr %s210, 4
        %s214 = sadd.s32 %s212, %s213
        %s215 = smul.addr %s214, 8
        %s216 = scalar_lea.vmem %s1, %s215
      $region24: #{multi_head_attention.8} parent=15 // pred_fallthru
        _
      // Predicated region
      $region25: #{multi_head_attention.8} parent=15 // pred_check
        %p217 = pneg %p109
      $region26: #{multi_head_attention.8} parent=15 // pred_check_branch
        %219 = sbr.rel (%p217) target = $region28
      $region27: #{multi_head_attention.8} parent=15 // pred_region
        %p220 = scmp.lt.s32.totalorder %s17, 1
        %s221 = scalar_select %p220, %s17, 1
        %p222 = scmp.lt.s32.totalorder %s18, 3
        %s223 = scalar_select %p222, %s18, 3
        %s224 = smul.addr %s221, 4
        %s225 = sadd.s32 %s223, %s224
        %s226 = smul.addr %s225, 8
        %s227 = scalar_lea.vmem %s2, %s226
      $region28: #{multi_head_attention.8} parent=15 // pred_fallthru
        _
      // Predicated region
      $region29: #{multi_head_attention.8} parent=15 // pred_check
        %p228 = pneg %p137
      $region30: #{multi_head_attention.8} parent=15 // pred_check_branch
        %230 = sbr.rel (%p228) target = $region32
      $region31: #{multi_head_attention.8} parent=15 // pred_region
        %p231 = scmp.lt.s32.totalorder %s17, 1
        %s232 = scalar_select %p231, %s17, 1
        %p233 = scmp.lt.s32.totalorder %s19, 0
        %s234 = scalar_select %p233, %s19, 0
        %s235 = sadd.s32 %s234, %s232
        %s236 = smul.addr %s235, 8
        %s237 = scalar_lea.vmem %s3, %s236
      $region32: #{multi_head_attention.8} parent=15 // pred_fallthru
        _
    $region16: #{multi_head_attention.8} parent=5 // pred_fallthru
      _
    %p238 = scmp.le.s32.totalorder 1, %s10
    %p239 = scmp.lt.s32.totalorder %s10, 9
    %p240 = pnand %p238, %p239
    %p241 = pneg %p240
    // Predicated region
    $region33: #{multi_head_attention.8} parent=5 // pred_check
      _
    $region34: #{multi_head_attention.8} parent=5 // pred_check_branch
      %243 = sbr.rel (%p240) target = $region36
    $region35: #{multi_head_attention.8} parent=5 // pred_region
      %s244 = ssub.s32 %s10, 1
      %p245 = scmp.lt.s32.totalorder %s20, 1
      %s246 = scalar_select %p245, %s20, 1
      %p247 = scmp.lt.s32.totalorder %s21, 3
      %s248 = scalar_select %p247, %s21, 3
      %p249 = scmp.lt.s32.totalorder %s22, 0
      %s250 = scalar_select %p249, %s22, 0
      %s251 = sadd.s32 %s250, %s248
      %s252 = smul.addr %s246, 4
      %s253 = sadd.s32 %s251, %s252
      %s254 = smul.addr %s253, 8
      %s255 = scalar_lea.vmem %s0, %s254
      %p256 = pneg %p59
      %p257 = pneg %p56
      %p258 = scmp.lt.s32.totalorder %s20, 1
      %s259 = scalar_select %p258, %s20, 1
      %p260 = scmp.lt.s32.totalorder %s21, 3
      %s261 = scalar_select %p260, %s21, 3
      %s262 = smul.addr %s259, 4
      %s263 = sadd.s32 %s261, %s262
      %s264 = smul.addr %s263, 8
      %s265 = scalar_lea.vmem %s1, %s264
      %p266 = pneg %p87
      %p267 = pneg %p84
      %p268 = scmp.lt.s32.totalorder %s20, 1
      %s269 = scalar_select %p268, %s20, 1
      %p270 = scmp.lt.s32.totalorder %s21, 3
      %s271 = scalar_select %p270, %s21, 3
      %s272 = smul.addr %s269, 4
      %s273 = sadd.s32 %s271, %s272
      %s274 = smul.addr %s273, 8
      %s275 = scalar_lea.vmem %s2, %s274
      %p276 = pneg %p115
      %p277 = pneg %p112
      %p278 = scmp.lt.s32.totalorder %s20, 1
      %s279 = scalar_select %p278, %s20, 1
      %p280 = scmp.lt.s32.totalorder %s22, 0
      %s281 = scalar_select %p280, %s22, 0
      %s282 = sadd.s32 %s281, %s279
      %s283 = smul.addr %s282, 8
      %s284 = scalar_lea.vmem %s3, %s283
      %p285 = pneg %p143
      %p286 = pneg %p140
      %p287 = pneg %p173
      %p288 = pneg %p170
      %p289 = scmp.lt.s32.totalorder %s20, 1
      %s290 = scalar_select %p289, %s20, 1
      %p291 = scmp.lt.s32.totalorder %s21, 3
      %s292 = scalar_select %p291, %s21, 3
      %p293 = scmp.lt.s32.totalorder %s22, 0
      %s294 = scalar_select %p293, %s22, 0
      %s295 = sadd.s32 %s294, %s292
      %s296 = smul.addr %s290, 4
      %s297 = sadd.s32 %s295, %s296
      %s298 = smul.addr %s297, 8
      %s299 = scalar_lea.vmem %s4, %s298
      %p300 = scmp.lt.s32.totalorder %s20, 1
      %s301 = scalar_select %p300, %s20, 1
      %p302 = scmp.lt.s32.totalorder %s21, 3
      %s303 = scalar_select %p302, %s21, 3
      %p304 = scmp.lt.s32.totalorder %s22, 0
      %s305 = scalar_select %p304, %s22, 0
      %s306 = sadd.s32 %s305, %s303
      %s307 = smul.addr %s301, 4
      %s308 = sadd.s32 %s306, %s307
      %s309 = smul.addr %s308, 8
      %s310 = scalar_lea.vmem %s0, %s309
      %p311 = scmp.lt.s32.totalorder %s20, 1
      %s312 = scalar_select %p311, %s20, 1
      %p313 = scmp.lt.s32.totalorder %s21, 3
      %s314 = scalar_select %p313, %s21, 3
      %s315 = smul.addr %s312, 4
      %s316 = sadd.s32 %s314, %s315
      %s317 = smul.addr %s316, 8
      %s318 = scalar_lea.vmem %s1, %s317
      %p319 = scmp.lt.s32.totalorder %s20, 1
      %s320 = scalar_select %p319, %s20, 1
      %p321 = scmp.lt.s32.totalorder %s21, 3
      %s322 = scalar_select %p321, %s21, 3
      %s323 = smul.addr %s320, 4
      %s324 = sadd.s32 %s322, %s323
      %s325 = smul.addr %s324, 8
      %s326 = scalar_lea.vmem %s2, %s325
      %p327 = scmp.lt.s32.totalorder %s20, 1
      %s328 = scalar_select %p327, %s20, 1
      %p329 = scmp.lt.s32.totalorder %s22, 0
      %s330 = scalar_select %p329, %s22, 0
      %s331 = sadd.s32 %s330, %s328
      %s332 = smul.addr %s331, 8
      %s333 = scalar_lea.vmem %s3, %s332
      %p334 = scmp.lt.s32.totalorder %s20, 1
      %s335 = scalar_select %p334, %s20, 1
      %p336 = scmp.lt.s32.totalorder %s21, 3
      %s337 = scalar_select %p336, %s21, 3
      %p338 = scmp.lt.s32.totalorder %s22, 0
      %s339 = scalar_select %p338, %s22, 0
      %s340 = sadd.s32 %s339, %s337
      %s341 = smul.addr %s335, 4
      %s342 = sadd.s32 %s340, %s341
      %s343 = smul.addr %s342, 8
      %s344 = scalar_lea.vmem %s4, %s343
      %v345 = vld [vmem:[%s310] sm:$0xff]
      %v346 = vld [vmem:[%s318] sm:$0xff]
      %v347 = vld [vmem:[%s326] sm:$0xff]
      %v348 = vld [vmem:[%s333] sm:$0xff]
      %vm349 = vcmask 64512
      %v351 = vsel %vm349, %v345, 0
      %v354 = vsel %vm349, %v346, 0
      %356 = vmatprep.subr.mxu0 0.0
      %357 = vmatpush1.xpose.msra.mxu0 0.0
      %358 = vmatprep.subr.mxu0 0.0
      %359 = vmatpush1.xpose.msra.mxu0 0.0
      %360 = vmatprep.subr.mxu0 0.0
      %361 = vmatpush1.xpose.msra.mxu0 0.0
      %362 = vmatprep.subr.mxu0 0.0
      %363 = vmatpush1.xpose.msra.mxu0 0.0
      %364 = vmatprep.subr.mxu0 0.0
      %365 = vmatpush1.xpose.msra.mxu0 0.0
      %366 = vmatprep.subr.mxu0 0.0
      %367 = vmatpush1.xpose.msra.mxu0 0.0
      %368 = vmatprep.subr.mxu0 0.0
      %369 = vmatpush1.xpose.msra.mxu0 0.0
      %370 = vmatprep.subr.mxu0 0.0
      %371 = vmatpush1.xpose.msra.mxu0 0.0
      %372 = vmatprep.subr.mxu0 0.0
      %373 = vmatpush1.xpose.msra.mxu0 0.0
      %374 = vmatprep.subr.mxu0 0.0
      %375 = vmatpush1.xpose.msra.mxu0 0.0
      %376 = vmatprep.subr.mxu0 0.0
      %377 = vmatpush1.xpose.msra.mxu0 0.0
      %378 = vmatprep.subr.mxu0 0.0
      %379 = vmatpush1.xpose.msra.mxu0 0.0
      %380 = vmatprep.subr.mxu0 0.0
      %381 = vmatpush1.xpose.msra.mxu0 0.0
      %382 = vmatprep.subr.mxu0 0.0
      %383 = vmatpush1.xpose.msra.mxu0 0.0
      %384 = vmatprep.subr.mxu0 0.0
      %385 = vmatpush1.xpose.msra.mxu0 0.0
      %386 = vmatprep.subr.mxu0 0.0
      %387 = vmatpush1.xpose.msra.mxu0 %v354
      %388 = vmatprep.subr.mxu0 0.0
      %389 = vmatpush2.xpose.msra.mxu0 0.0
      %390 = vmatprep.subr.mxu0 0.0
      %391 = vmatpush2.xpose.msra.mxu0 0.0
      %392 = vmatprep.subr.mxu0 0.0
      %393 = vmatpush2.xpose.msra.mxu0 0.0
      %394 = vmatprep.subr.mxu0 0.0
      %395 = vmatpush2.xpose.msra.mxu0 0.0
      %396 = vmatprep.subr.mxu0 0.0
      %397 = vmatpush2.xpose.msra.mxu0 0.0
      %398 = vmatprep.subr.mxu0 0.0
      %399 = vmatpush2.xpose.msra.mxu0 0.0
      %400 = vmatprep.subr.mxu0 0.0
      %401 = vmatpush2.xpose.msra.mxu0 0.0
      %402 = vmatprep.subr.mxu0 0.0
      %403 = vmatpush2.xpose.msra.mxu0 0.0
      %404 = vmatprep.subr.mxu0 0.0
      %405 = vmatpush2.xpose.msra.mxu0 0.0
      %406 = vmatprep.subr.mxu0 0.0
      %407 = vmatpush2.xpose.msra.mxu0 0.0
      %408 = vmatprep.subr.mxu0 0.0
      %409 = vmatpush2.xpose.msra.mxu0 0.0
      %410 = vmatprep.subr.mxu0 0.0
      %411 = vmatpush2.xpose.msra.mxu0 0.0
      %412 = vmatprep.subr.mxu0 0.0
      %413 = vmatpush2.xpose.msra.mxu0 0.0
      %414 = vmatprep.subr.mxu0 0.0
      %415 = vmatpush2.xpose.msra.mxu0 0.0
      %416 = vmatprep.subr.mxu0 0.0
      %417 = vmatpush2.xpose.msra.mxu0 0.0
      %418 = vmatprep.subr.mxu0 0.0
      %419 = vmatpush2.xpose.msra.mxu0 0.0
      %420 = vmatprep.mubr.f32.mxu0 0.0
      %421 = vmatmul.mubr.f32.gmra.mxu0 %v351
      %v422 = vpop.f32.mrf.mxu0
      %v423 = vadd.f32 0.0, %v422
      %v424 = vpop.f32.mrf.mxu0
      %425 = vdwg.mxu0
      %v426 = vmul.f32 %v423, 0.35355338
      %vm427 = vcmp.eq.s32.totalorder %v348, 0
      %v428 = vsel %vm427, -1e+09, %v426
      %v429 = vsel %vm349, %v428, -inf
      %430 = vmax.xlane.f32.xlu0 %v429
      %v431 = vpop.xlane.xlu0 %430
      %v432 = vsub.f32 %v428, %v431
      %v433 = vmul.f32 %v432, 1.442695
      %v434 = vpow.pop %v433
      %v435 = vsel %vm349, %v434, 0.0
      %436 = vadd.xlane.f32.xlu0 %v435
      %v437 = vpop.xlane.xlu0 %436
      %v438 = vrcp.pop %v437
      %v439 = vmul.f32 %v434, %v438
      %v441 = vsel %vm349, %v439, 0
      %443 = vmatprep.subr.mxu0 0.0
      %444 = vmatpush1.msra.mxu0 0.0
      %445 = vmatprep.subr.mxu0 0.0
      %446 = vmatpush1.msra.mxu0 0.0
      %447 = vmatprep.subr.mxu0 0.0
      %448 = vmatpush1.msra.mxu0 0.0
      %449 = vmatprep.subr.mxu0 0.0
      %450 = vmatpush1.msra.mxu0 0.0
      %451 = vmatprep.subr.mxu0 0.0
      %452 = vmatpush1.msra.mxu0 0.0
      %453 = vmatprep.subr.mxu0 0.0
      %454 = vmatpush1.msra.mxu0 0.0
      %455 = vmatprep.subr.mxu0 0.0
      %456 = vmatpush1.msra.mxu0 0.0
      %457 = vmatprep.subr.mxu0 0.0
      %458 = vmatpush1.msra.mxu0 0.0
      %459 = vmatprep.subr.mxu0 0.0
      %460 = vmatpush1.msra.mxu0 0.0
      %461 = vmatprep.subr.mxu0 0.0
      %462 = vmatpush1.msra.mxu0 0.0
      %463 = vmatprep.subr.mxu0 0.0
      %464 = vmatpush1.msra.mxu0 0.0
      %465 = vmatprep.subr.mxu0 0.0
      %466 = vmatpush1.msra.mxu0 0.0
      %467 = vmatprep.subr.mxu0 0.0
      %468 = vmatpush1.msra.mxu0 0.0
      %469 = vmatprep.subr.mxu0 0.0
      %470 = vmatpush1.msra.mxu0 0.0
      %471 = vmatprep.subr.mxu0 0.0
      %472 = vmatpush1.msra.mxu0 0.0
      %473 = vmatprep.subr.mxu0 0.0
      %474 = vmatpush1.msra.mxu0 %v347
      %475 = vmatprep.subr.mxu0 0.0
      %476 = vmatpush2.msra.mxu0 0.0
      %477 = vmatprep.subr.mxu0 0.0
      %478 = vmatpush2.msra.mxu0 0.0
      %479 = vmatprep.subr.mxu0 0.0
      %480 = vmatpush2.msra.mxu0 0.0
      %481 = vmatprep.subr.mxu0 0.0
      %482 = vmatpush2.msra.mxu0 0.0
      %483 = vmatprep.subr.mxu0 0.0
      %484 = vmatpush2.msra.mxu0 0.0
      %485 = vmatprep.subr.mxu0 0.0
      %486 = vmatpush2.msra.mxu0 0.0
      %487 = vmatprep.subr.mxu0 0.0
      %488 = vmatpush2.msra.mxu0 0.0
      %489 = vmatprep.subr.mxu0 0.0
      %490 = vmatpush2.msra.mxu0 0.0
      %491 = vmatprep.subr.mxu0 0.0
      %492 = vmatpush2.msra.mxu0 0.0
      %493 = vmatprep.subr.mxu0 0.0
      %494 = vmatpush2.msra.mxu0 0.0
      %495 = vmatprep.subr.mxu0 0.0
      %496 = vmatpush2.msra.mxu0 0.0
      %497 = vmatprep.subr.mxu0 0.0
      %498 = vmatpush2.msra.mxu0 0.0
      %499 = vmatprep.subr.mxu0 0.0
      %500 = vmatpush2.msra.mxu0 0.0
      %501 = vmatprep.subr.mxu0 0.0
      %502 = vmatpush2.msra.mxu0 0.0
      %503 = vmatprep.subr.mxu0 0.0
      %504 = vmatpush2.msra.mxu0 0.0
      %505 = vmatprep.subr.mxu0 0.0
      %506 = vmatpush2.msra.mxu0 0.0
      %507 = vmatprep.mubr.f32.mxu0 0.0
      %508 = vmatmul.mubr.f32.gmra.mxu0 %v441
      %v509 = vpop.f32.mrf.mxu0
      %v510 = vadd.f32 0.0, %v509
      %v511 = vpop.f32.mrf.mxu0
      %512 = vdwg.mxu0
      %513 = vst.msk [vmem:[%s344] sm:$0xff] %vm349, %v510
      %p514 = scmp.lt.s32.totalorder %s20, 1
      %s515 = scalar_select %p514, %s20, 1
      %p516 = scmp.lt.s32.totalorder %s21, 3
      %s517 = scalar_select %p516, %s21, 3
      %p518 = scmp.lt.s32.totalorder %s22, 0
      %s519 = scalar_select %p518, %s22, 0
      %s520 = sadd.s32 %s519, %s517
      %s521 = smul.addr %s515, 4
      %s522 = sadd.s32 %s520, %s521
      %s523 = smul.addr %s522, 8
      %s524 = scalar_lea.vmem %s4, %s523
      // Predicated region
      $region37: #{multi_head_attention.8} parent=35 // pred_check
        %p525 = pneg %p170
      $region38: #{multi_head_attention.8} parent=35 // pred_check_branch
        %527 = sbr.rel (%p525) target = $region40
      $region39: #{multi_head_attention.8} parent=35 // pred_region
        _
      $region40: #{multi_head_attention.8} parent=35 // pred_fallthru
        _
    $region36: #{multi_head_attention.8} parent=5 // pred_fallthru
      _
    %p528 = scmp.le.s32.totalorder 2, %s10
    // Predicated region
    $region41: #{multi_head_attention.8} parent=5 // pred_check
      %p529 = pneg %p528
    $region42: #{multi_head_attention.8} parent=5 // pred_check_branch
      %531 = sbr.rel (%p529) target = $region44
    $region43: #{multi_head_attention.8} parent=5 // pred_region
      %s532 = ssub.s32 %s10, 2
      // Predicated region
      $region45: #{multi_head_attention.8} parent=43 // pred_check
        %p533 = pneg %p176
      $region46: #{multi_head_attention.8} parent=43 // pred_check_branch
        %535 = sbr.rel (%p533) target = $region48
      $region47: #{multi_head_attention.8} parent=43 // pred_region
        %p536 = scmp.lt.s32.totalorder %s23, 1
        %s537 = scalar_select %p536, %s23, 1
        %p538 = scmp.lt.s32.totalorder %s24, 3
        %s539 = scalar_select %p538, %s24, 3
        %p540 = scmp.lt.s32.totalorder %s25, 0
        %s541 = scalar_select %p540, %s25, 0
        %s542 = sadd.s32 %s541, %s539
        %s543 = smul.addr %s537, 4
        %s544 = sadd.s32 %s542, %s543
        %s545 = smul.addr %s544, 8
        %s546 = scalar_lea.vmem %s4, %s545
      $region48: #{multi_head_attention.8} parent=43 // pred_fallthru
        _
    $region44: #{multi_head_attention.8} parent=5 // pred_fallthru
      _
  $region6: #{multi_head_attention.8} parent=0 // loop_footer
    %s14 = sadd.s32 1, %s10
  $region7: #{multi_head_attention.8} parent=0 // loop_footer_branch
    %9 = sbr.rel target = $region3
  $region8: #{multi_head_attention.8} parent=0 // loop_exit
    _

</llo_original>
